<compile_context>
chip_gen: v7x
topology: tpu7x:2x2x1
jax: 0.10.0
libtpu: 0.0.40
codegen_flags: <defaults>
</compile_context>

<pallas_src>
import functools

import jax
import jax.numpy as jnp
from jax import lax
from jax.experimental import pallas as pl
from jax.experimental.pallas import tpu as pltpu


def _dot_nt(a, b):
    """a @ b.T on the MXU without materializing a transpose."""
    return lax.dot_general(a, b, (((1,), (1,)), ((), ())),
                           preferred_element_type=jnp.float32)


def _node_task_head_kernel(q_ref, bias_ref, dpos_ref, wqkv_ref, bqkv_ref,
                           wf_ref, bf_ref, out_ref, *, head_dim, approx_recip):
    """Grid = (batch, head); one (batch, head) pair per step.

    q_ref    : (1, n, E)       query (resident across the head axis)
    bias_ref : (1, 1, n, n)    attention-bias tile for this (batch, head)
    dpos_ref : (1, 3, n, n)    delta positions, component-major (resident across heads)
    wqkv_ref : (H, E, 3*hd)    fused per-head [Wq|Wk|Wv] (grid-resident)
    bqkv_ref : (H, 1, 3*hd)    fused per-head biases, f32 (grid-resident)
    wf_ref   : (H, 3, hd)      per-head slices of the force-projection weights
    bf_ref   : (3, 1)          force-projection biases
    out_ref  : (1, 3, n)       lane-dense output forces; doubles as head accumulator
    """
    h = pl.program_id(1)
    hd = head_dim

    @pl.when(h == 0)
    def _init():
        out_ref[...] = jnp.zeros_like(out_ref)

    x = q_ref[0]                                          # (n, E)

    # Fused QKV projection for this head: one (n, E) x (E, 3*hd) MXU matmul.
    qkv = jnp.dot(x, wqkv_ref[h], preferred_element_type=jnp.float32) + bqkv_ref[h]
    qh = qkv[:, 0 * hd:1 * hd]
    kh = qkv[:, 1 * hd:2 * hd]
    vh = qkv[:, 2 * hd:3 * hd]

    scaling = float(hd) ** (-0.5)
    attn = _dot_nt(qh * scaling, kh) + bias_ref[0, 0].astype(jnp.float32)   # (n, n)

    # Unnormalized softmax; the 1/rowsum factor is applied to the (3, n) per-head
    # partial instead of dividing the full (n, n) matrix.
    attn = attn - jnp.max(attn, axis=-1, keepdims=True)   # only XLU reduce per step
    p = jnp.exp(attn)                                     # (n, n), f32
    # TODO(synk): softmax_dropout(p=0.1) omitted (eval-mode semantics only).

    n = p.shape[0]
    ones_row = jnp.ones((1, n), jnp.float32)
    inv_l = pl.reciprocal(_dot_nt(ones_row, p), approx=approx_recip)        # (1, n)

    # Hoisted force projection: vf_t[c, j] = sum_d v[j, d] * wf[c, h*hd + d].
    vf_t = _dot_nt(wf_ref[h], vh)                         # (3, n)

    rows = []
    for c in range(3):
        w_c = p * dpos_ref[0, c].astype(jnp.float32)      # (n, n)  VPU multiply
        rows.append(_dot_nt(vf_t[c:c + 1, :], w_c))       # (1, n)  MXU matvec
    partial = jnp.concatenate(rows, axis=0)               # (3, n)  lane-dense

    out_ref[0] += partial * inv_l

    @pl.when(h == pl.num_programs(1) - 1)
    def _finalize():
        out_ref[0] += bf_ref[...]                         # (3, 1) broadcast over n


def _round_up(x, m):
    return -(-x // m) * m


def _padded_block_bytes(shape, itemsize):
    dims = list(shape)
    dims[-1] = _round_up(dims[-1], 128)
    if len(dims) >= 2:
        dims[-2] = _round_up(dims[-2], 8)
    size = itemsize
    for d in dims:
        size *= d
    return size


def _vmem_limit_bytes(n, embed_dim, head_dim, num_heads, stream_bytes):
    hd3 = 3 * head_dim
    # Streamed blocks (double-buffered by the pipeline).
    streamed = (_padded_block_bytes((1, n, embed_dim), stream_bytes)      # query
                + _padded_block_bytes((1, 1, n, n), stream_bytes)         # bias tile
                + _padded_block_bytes((1, 3, n, n), stream_bytes)         # delta_pos
                + _padded_block_bytes((1, 3, n), 4))                      # output
    # Grid-resident parameter blocks.
    params = (_padded_block_bytes((num_heads, embed_dim, hd3), stream_bytes)
              + _padded_block_bytes((num_heads, 1, hd3), 4)
              + _padded_block_bytes((num_heads, 3, head_dim), 4)
              + _padded_block_bytes((3, 1), 4))
    # Live in-kernel f32 temporaries: attn / p / p*dpos_c plus (n, 3hd)-sized values.
    temps = 5 * _padded_block_bytes((n, n), 4) + 3 * _padded_block_bytes((n, hd3), 4)
    want = 2 * streamed + 2 * params + temps + (2 << 20)
    try:
        cap = int(pltpu.get_tpu_info().vmem_capacity_bytes * 0.85)
    except Exception:
        cap = 48 << 20          # safe on every generation (>= 64 MiB physical)
    return min(max(want, 32 << 20), cap)


def node_task_head(query, attn_bias, delta_pos, params, num_heads, *, use_bf16=False):
    """Pallas forward of NodeTaskHead.  Returns (bsz, n_node, 3) float32."""
    bsz, n_node, embed_dim = query.shape
    head_dim = embed_dim // num_heads
    wq, bq, wk, bk, wv, bv, wf, bf = params

    def per_head_w(w):   # (E, E) -> (H, E, hd)
        return w.reshape(embed_dim, num_heads, head_dim).transpose(1, 0, 2)

    def per_head_b(b):   # (1, E) -> (H, 1, hd)
        return b.reshape(num_heads, 1, head_dim)

    # Fused per-head [q | k | v] weights / biases (weights stored (in, out)).
    wqkv = jnp.concatenate([per_head_w(wq), per_head_w(wk), per_head_w(wv)], axis=-1)
    bqkv = jnp.concatenate([per_head_b(bq), per_head_b(bk), per_head_b(bv)],
                           axis=-1).astype(jnp.float32)                    # (H, 1, 3hd)
    wf3 = wf.reshape(3, num_heads, head_dim).transpose(1, 0, 2).astype(jnp.float32)
    bf3 = bf.reshape(3, 1).astype(jnp.float32)

    bias4 = attn_bias.reshape(bsz, num_heads, n_node, n_node)
    # TODO(synk): producing delta_pos component-major upstream would remove this
    # extra HBM pass over the largest input.
    dpos_t = jnp.transpose(delta_pos, (0, 3, 1, 2))                        # (b, 3, n, n)

    q_in = query
    if use_bf16:
        q_in = q_in.astype(jnp.bfloat16)
        wqkv = wqkv.astype(jnp.bfloat16)
        bias4 = bias4.astype(jnp.bfloat16)   # halves the dominant per-step DMA
        dpos_t = dpos_t.astype(jnp.bfloat16)

    kernel = functools.partial(_node_task_head_kernel,
                               head_dim=head_dim, approx_recip=use_bf16)

    hd3 = 3 * head_dim
    in_specs = [
        pl.BlockSpec((1, n_node, embed_dim), lambda b, h: (b, 0, 0)),
        pl.BlockSpec((1, 1, n_node, n_node), lambda b, h: (b, h, 0, 0)),
        pl.BlockSpec((1, 3, n_node, n_node), lambda b, h: (b, 0, 0, 0)),
        # Parameters: full-array blocks with constant index maps -> DMA'd into
        # VMEM once and kept grid-resident; the kernel indexes the head axis.
        pl.BlockSpec((num_heads, embed_dim, hd3), lambda b, h: (0, 0, 0)),
        pl.BlockSpec((num_heads, 1, hd3), lambda b, h: (0, 0, 0)),
        pl.BlockSpec((num_heads, 3, head_dim), lambda b, h: (0, 0, 0)),
        pl.BlockSpec((3, 1), lambda b, h: (0, 0)),
    ]
    out_spec = pl.BlockSpec((1, 3, n_node), lambda b, h: (b, 0, 0))

    stream_bytes = 2 if use_bf16 else 4
    # TODO(synk): for very large n on v7x (64 MiB VMEM), add a query-row tiling
    # grid axis (bsz, n//tq, H) to shrink the O(n^2) working set.
    out_t = pl.pallas_call(
        kernel,
        grid=(bsz, num_heads),
        in_specs=in_specs,
        out_specs=out_spec,
        out_shape=jax.ShapeDtypeStruct((bsz, 3, n_node), jnp.float32),
        compiler_params=pltpu.CompilerParams(
            dimension_semantics=("parallel", "arbitrary"),
            vmem_limit_bytes=_vmem_limit_bytes(
                n_node, embed_dim, head_dim, num_heads, stream_bytes)),
    )(q_in, bias4, dpos_t, wqkv, bqkv, wf3, bf3)

    # Kernel emits a lane-dense (b, 3, n) slab; tiny layout transpose back here.
    return jnp.transpose(out_t, (0, 2, 1))


def reference(query, attn_bias, delta_pos, params, num_heads):
    """Pure-JAX reference mirroring the PyTorch forward (eval mode)."""
    wq, bq, wk, bk, wv, bv, wf, bf = params
    bsz, n, E = query.shape
    hd = E // num_heads
    scaling = float(hd) ** (-0.5)
    q = (query @ wq + bq).reshape(bsz, n, num_heads, hd).transpose(0, 2, 1, 3) * scaling
    k = (query @ wk + bk).reshape(bsz, n, num_heads, hd).transpose(0, 2, 1, 3)
    v = (query @ wv + bv).reshape(bsz, n, num_heads, hd).transpose(0, 2, 1, 3)
    attn = q @ jnp.swapaxes(k, -1, -2)
    attn = attn.reshape(-1, n, n) + attn_bias
    probs = jax.nn.softmax(attn, -1).reshape(bsz, num_heads, n, n)
    rot = probs[..., None] * delta_pos[:, None].astype(probs.dtype)
    rot = rot.transpose(0, 1, 4, 2, 3)                   # (b, H, 3, n, n)
    x = rot @ v[:, :, None]                              # (b, H, 3, n, hd)
    x = x.transpose(0, 3, 2, 1, 4).reshape(bsz, n, 3, E)
    f = jnp.einsum('bnce,ce->bnc', x, wf) + bf[0]
    return f.astype(jnp.float32)


if __name__ == "__main__":
    bsz, n_node, embed_dim, num_heads = 2, 8, 32, 4

    key = jax.random.PRNGKey(0)
    ks = jax.random.split(key, 16)
    s = 0.1
    # Linear params: weights stored as (in, out); force weights row c = force_proj{c+1}.
    wq = jax.random.normal(ks[0], (embed_dim, embed_dim), jnp.float32) * s
    bq = jax.random.normal(ks[1], (1, embed_dim), jnp.float32) * s
    wk = jax.random.normal(ks[2], (embed_dim, embed_dim), jnp.float32) * s
    bk = jax.random.normal(ks[3], (1, embed_dim), jnp.float32) * s
    wv = jax.random.normal(ks[4], (embed_dim, embed_dim), jnp.float32) * s
    bv = jax.random.normal(ks[5], (1, embed_dim), jnp.float32) * s
    wf = jax.random.normal(ks[6], (3, embed_dim), jnp.float32) * s
    bf = jax.random.normal(ks[7], (1, 3), jnp.float32) * s
    params = (wq, bq, wk, bk, wv, bv, wf, bf)

    query = jax.random.normal(ks[8], (bsz, n_node, embed_dim), jnp.float32)
    attn_bias = jax.random.normal(ks[9], (bsz * num_heads, n_node, n_node), jnp.float32)
    delta_pos = jax.random.normal(ks[10], (bsz, n_node, n_node, 3), jnp.float32)

    ref = reference(query, attn_bias, delta_pos, params, num_heads)

    # f32 path (exact reciprocal in the softmax normalization).
    out = node_task_head(query, attn_bias, delta_pos, params, num_heads)
    out = jax.block_until_ready(out)
    assert out.shape == (bsz, n_node, 3) and out.dtype == jnp.float32
    err = float(jnp.max(jnp.abs(out - ref)))
    assert jnp.allclose(out, ref, rtol=1e-2, atol=1e-4), f"f32 path max abs err {err}"

    # bf16 streaming path (query/weights/bias/delta_pos in bf16, f32 math) — looser tol.
    out_bf16 = node_task_head(query, attn_bias, delta_pos, params, num_heads,
                              use_bf16=True)
    out_bf16 = jax.block_until_ready(out_bf16)
    err_bf16 = float(jnp.max(jnp.abs(out_bf16 - ref)))
    assert jnp.allclose(out_bf16, ref, rtol=1e-1, atol=2e-2), (
        f"bf16 path max abs err {err_bf16}")

    print("KERNEL_OK")
</pallas_src>

<mosaic_0001>
module attributes {stable_mosaic.version = 11 : i64} {
  func.func @_node_task_head_kernel(%arg0: i32, %arg1: i32, %arg2: memref<1x8x32xf32, #tpu.memory_space<vmem>>, %arg3: memref<1x1x8x8xf32, #tpu.memory_space<vmem>>, %arg4: memref<1x3x8x8xf32, #tpu.memory_space<vmem>>, %arg5: memref<4x32x24xf32, #tpu.memory_space<vmem>>, %arg6: memref<4x1x24xf32, #tpu.memory_space<vmem>>, %arg7: memref<4x3x8xf32, #tpu.memory_space<vmem>>, %arg8: memref<3x1xf32, #tpu.memory_space<vmem>>, %arg9: memref<1x3x8xf32, #tpu.memory_space<vmem>>) attributes {dimension_semantics = [#tpu.dimension_semantics<parallel>, #tpu.dimension_semantics<arbitrary>], iteration_bounds = array<i64: 2, 4>, scalar_prefetch = 0 : i64, scratch_operands = 0 : i64, tpu.core_type = #tpu.core_type<tc>, window_params = [{transform_indices = @transform_0, window_bounds = array<i64: 1, 8, 32>}, {transform_indices = @transform_1, window_bounds = array<i64: 1, 1, 8, 8>}, {transform_indices = @transform_2, window_bounds = array<i64: 1, 3, 8, 8>}, {pipeline_mode = #tpu.pipeline_mode<synchronous>, transform_indices = @transform_3, window_bounds = array<i64: 4, 32, 24>}, {pipeline_mode = #tpu.pipeline_mode<synchronous>, transform_indices = @transform_4, window_bounds = array<i64: 4, 1, 24>}, {pipeline_mode = #tpu.pipeline_mode<synchronous>, transform_indices = @transform_5, window_bounds = array<i64: 4, 3, 8>}, {pipeline_mode = #tpu.pipeline_mode<synchronous>, transform_indices = @transform_6, window_bounds = array<i64: 3, 1>}, {transform_indices = @transform_7, window_bounds = array<i64: 1, 3, 8>}]} {
    %c0_i32 = arith.constant 0 : i32
    %0 = arith.cmpi eq, %arg1, %c0_i32 : i32
    %1 = arith.extui %0 : i1 to i32
    %c0_i32_0 = arith.constant 0 : i32
    %2 = arith.cmpi ne, %1, %c0_i32_0 : i32
    scf.if %2 {
      %cst_39 = arith.constant 0.000000e+00 : f32
      %62 = vector.broadcast %cst_39 : f32 to vector<1x3x8xf32>
      %c0_40 = arith.constant 0 : index
      %c0_41 = arith.constant 0 : index
      %c0_42 = arith.constant 0 : index
      %63 = vector.load %arg9[%c0_40, %c0_41, %c0_42] : memref<1x3x8xf32, #tpu.memory_space<vmem>>, vector<1x3x8xf32>
      tpu.vector_store %arg9[%c0_40, %c0_41, %c0_42], %62 {strides = array<i32>} : memref<1x3x8xf32, #tpu.memory_space<vmem>>, vector<1x3x8xf32>,
    } else {
    }
    %c0 = arith.constant 0 : index
    %c0_1 = arith.constant 0 : index
    %c0_2 = arith.constant 0 : index
    %3 = vector.load %arg2[%c0, %c0_1, %c0_2] : memref<1x8x32xf32, #tpu.memory_space<vmem>>, vector<1x8x32xf32>
    %4 = vector.shape_cast %3 : vector<1x8x32xf32> to vector<8x32xf32>
    %5 = arith.index_cast %arg1 : i32 to index
    %c0_3 = arith.constant 0 : index
    %c0_4 = arith.constant 0 : index
    %6 = vector.load %arg5[%5, %c0_3, %c0_4] : memref<4x32x24xf32, #tpu.memory_space<vmem>>, vector<1x32x24xf32>
    %7 = vector.shape_cast %6 : vector<1x32x24xf32> to vector<32x24xf32>
    %cst = arith.constant dense<0.000000e+00> : vector<8x24xf32>
    %8 = tpu.matmul %4, %7, %cst {dimension_numbers = #tpu.dot_dimension_numbers<[1], [0], [0], [1], [0, 0, 1, 1], [], []>} : vector<8x32xf32>, vector<32x24xf32>, vector<8x24xf32> -> vector<8x24xf32>
    %9 = arith.index_cast %arg1 : i32 to index
    %c0_5 = arith.constant 0 : index
    %c0_6 = arith.constant 0 : index
    %10 = vector.load %arg6[%9, %c0_5, %c0_6] : memref<4x1x24xf32, #tpu.memory_space<vmem>>, vector<1x1x24xf32>
    %11 = vector.shape_cast %10 : vector<1x1x24xf32> to vector<1x24xf32>
    %12 = vector.broadcast %11 : vector<1x24xf32> to vector<8x24xf32>
    %13 = arith.addf %8, %12 : vector<8x24xf32>
    %14 = vector.extract_strided_slice %13 {offsets = [0, 0], sizes = [8, 8], strides = [1, 1]} : vector<8x24xf32> to vector<8x8xf32>
    %15 = vector.extract_strided_slice %13 {offsets = [0, 8], sizes = [8, 8], strides = [1, 1]} : vector<8x24xf32> to vector<8x8xf32>
    %16 = vector.extract_strided_slice %13 {offsets = [0, 16], sizes = [8, 8], strides = [1, 1]} : vector<8x24xf32> to vector<8x8xf32>
    %cst_7 = arith.constant 0.353553385 : f32
    %17 = vector.broadcast %cst_7 : f32 to vector<8x8xf32>
    %18 = arith.mulf %14, %17 : vector<8x8xf32>
    %cst_8 = arith.constant dense<0.000000e+00> : vector<8x8xf32>
    %19 = tpu.matmul %18, %15, %cst_8 {dimension_numbers = #tpu.dot_dimension_numbers<[1], [1], [0], [0], [0, 0, 1, 0], [], []>} : vector<8x8xf32>, vector<8x8xf32>, vector<8x8xf32> -> vector<8x8xf32>
    %c0_9 = arith.constant 0 : index
    %c0_10 = arith.constant 0 : index
    %c0_11 = arith.constant 0 : index
    %c0_12 = arith.constant 0 : index
    %20 = vector.load %arg3[%c0_9, %c0_10, %c0_11, %c0_12] : memref<1x1x8x8xf32, #tpu.memory_space<vmem>>, vector<1x1x8x8xf32>
    %21 = vector.shape_cast %20 : vector<1x1x8x8xf32> to vector<8x8xf32>
    %22 = arith.addf %19, %21 : vector<8x8xf32>
    %cst_13 = arith.constant dense<0xFF800000> : vector<8xf32>
    %23 = vector.multi_reduction <maximumf>, %22, %cst_13 [1] : vector<8x8xf32> to vector<8xf32>
    %24 = vector.shape_cast %23 : vector<8xf32> to vector<8x1xf32>
    %25 = vector.broadcast %24 : vector<8x1xf32> to vector<8x8xf32>
    %26 = arith.subf %22, %25 : vector<8x8xf32>
    %27 = math.exp %26 : vector<8x8xf32>
    %cst_14 = arith.constant 1.000000e+00 : f32
    %28 = vector.broadcast %cst_14 : f32 to vector<1x8xf32>
    %cst_15 = arith.constant dense<0.000000e+00> : vector<1x8xf32>
    %29 = tpu.matmul %28, %27, %cst_15 {dimension_numbers = #tpu.dot_dimension_numbers<[1], [1], [0], [0], [0, 0, 1, 0], [], []>} : vector<1x8xf32>, vector<8x8xf32>, vector<1x8xf32> -> vector<1x8xf32>
    %30 = tpu.reciprocal %29 : vector<1x8xf32> -> vector<1x8xf32>
    %31 = arith.index_cast %arg1 : i32 to index
    %c0_16 = arith.constant 0 : index
    %c0_17 = arith.constant 0 : index
    %32 = vector.load %arg7[%31, %c0_16, %c0_17] : memref<4x3x8xf32, #tpu.memory_space<vmem>>, vector<1x3x8xf32>
    %33 = vector.shape_cast %32 : vector<1x3x8xf32> to vector<3x8xf32>
    %cst_18 = arith.constant dense<0.000000e+00> : vector<3x8xf32>
    %34 = tpu.matmul %33, %16, %cst_18 {dimension_numbers = #tpu.dot_dimension_numbers<[1], [1], [0], [0], [0, 0, 1, 0], [], []>} : vector<3x8xf32>, vector<8x8xf32>, vector<3x8xf32> -> vector<3x8xf32>
    %c0_19 = arith.constant 0 : index
    %c0_20 = arith.constant 0 : index
    %c0_21 = arith.constant 0 : index
    %c0_22 = arith.constant 0 : index
    %35 = vector.load %arg4[%c0_19, %c0_20, %c0_21, %c0_22] : memref<1x3x8x8xf32, #tpu.memory_space<vmem>>, vector<1x1x8x8xf32>
    %36 = vector.shape_cast %35 : vector<1x1x8x8xf32> to vector<8x8xf32>
    %37 = arith.mulf %27, %36 : vector<8x8xf32>
    %38 = vector.extract_strided_slice %34 {offsets = [0, 0], sizes = [1, 8], strides = [1, 1]} : vector<3x8xf32> to vector<1x8xf32>
    %cst_23 = arith.constant dense<0.000000e+00> : vector<1x8xf32>
    %39 = tpu.matmul %38, %37, %cst_23 {dimension_numbers = #tpu.dot_dimension_numbers<[1], [1], [0], [0], [0, 0, 1, 0], [], []>} : vector<1x8xf32>, vector<8x8xf32>, vector<1x8xf32> -> vector<1x8xf32>
    %c0_24 = arith.constant 0 : index
    %c1 = arith.constant 1 : index
    %c0_25 = arith.constant 0 : index
    %c0_26 = arith.constant 0 : index
    %40 = vector.load %arg4[%c0_24, %c1, %c0_25, %c0_26] : memref<1x3x8x8xf32, #tpu.memory_space<vmem>>, vector<1x1x8x8xf32>
    %41 = vector.shape_cast %40 : vector<1x1x8x8xf32> to vector<8x8xf32>
    %42 = arith.mulf %27, %41 : vector<8x8xf32>
    %43 = vector.extract_strided_slice %34 {offsets = [1, 0], sizes = [1, 8], strides = [1, 1]} : vector<3x8xf32> to vector<1x8xf32>
    %cst_27 = arith.constant dense<0.000000e+00> : vector<1x8xf32>
    %44 = tpu.matmul %43, %42, %cst_27 {dimension_numbers = #tpu.dot_dimension_numbers<[1], [1], [0], [0], [0, 0, 1, 0], [], []>} : vector<1x8xf32>, vector<8x8xf32>, vector<1x8xf32> -> vector<1x8xf32>
    %c0_28 = arith.constant 0 : index
    %c2 = arith.constant 2 : index
    %c0_29 = arith.constant 0 : index
    %c0_30 = arith.constant 0 : index
    %45 = vector.load %arg4[%c0_28, %c2, %c0_29, %c0_30] : memref<1x3x8x8xf32, #tpu.memory_space<vmem>>, vector<1x1x8x8xf32>
    %46 = vector.shape_cast %45 : vector<1x1x8x8xf32> to vector<8x8xf32>
    %47 = arith.mulf %27, %46 : vector<8x8xf32>
    %48 = vector.extract_strided_slice %34 {offsets = [2, 0], sizes = [1, 8], strides = [1, 1]} : vector<3x8xf32> to vector<1x8xf32>
    %cst_31 = arith.constant dense<0.000000e+00> : vector<1x8xf32>
    %49 = tpu.matmul %48, %47, %cst_31 {dimension_numbers = #tpu.dot_dimension_numbers<[1], [1], [0], [0], [0, 0, 1, 0], [], []>} : vector<1x8xf32>, vector<8x8xf32>, vector<1x8xf32> -> vector<1x8xf32>
    %50 = tpu.concatenate %39, %44, %49 in 0 : vector<1x8xf32>, vector<1x8xf32>, vector<1x8xf32> -> vector<3x8xf32>
    %c0_32 = arith.constant 0 : index
    %c0_33 = arith.constant 0 : index
    %c0_34 = arith.constant 0 : index
    %51 = vector.load %arg9[%c0_32, %c0_33, %c0_34] : memref<1x3x8xf32, #tpu.memory_space<vmem>>, vector<1x3x8xf32>
    %52 = vector.shape_cast %51 : vector<1x3x8xf32> to vector<3x8xf32>
    %53 = vector.broadcast %30 : vector<1x8xf32> to vector<3x8xf32>
    %54 = arith.mulf %50, %53 : vector<3x8xf32>
    %55 = arith.addf %52, %54 : vector<3x8xf32>
    %c0_35 = arith.constant 0 : index
    %c0_36 = arith.constant 0 : index
    %c0_37 = arith.constant 0 : index
    %56 = vector.load %arg9[%c0_35, %c0_36, %c0_37] : memref<1x3x8xf32, #tpu.memory_space<vmem>>, vector<1x3x8xf32>
    %57 = vector.shape_cast %56 : vector<1x3x8xf32> to vector<3x8xf32>
    %58 = vector.shape_cast %55 : vector<3x8xf32> to vector<1x3x8xf32>
    tpu.vector_store %arg9[%c0_35, %c0_36, %c0_37], %58 {strides = array<i32>} : memref<1x3x8xf32, #tpu.memory_space<vmem>>, vector<1x3x8xf32>,
    %c3_i32 = arith.constant 3 : i32
    %59 = arith.cmpi eq, %arg1, %c3_i32 : i32
    %60 = arith.extui %59 : i1 to i32
    %c0_i32_38 = arith.constant 0 : i32
    %61 = arith.cmpi ne, %60, %c0_i32_38 : i32
    scf.if %61 {
      %c0_39 = arith.constant 0 : index
      %c0_40 = arith.constant 0 : index
      %c0_41 = arith.constant 0 : index
      %62 = vector.load %arg9[%c0_39, %c0_40, %c0_41] : memref<1x3x8xf32, #tpu.memory_space<vmem>>, vector<1x3x8xf32>
      %63 = vector.shape_cast %62 : vector<1x3x8xf32> to vector<3x8xf32>
      %c0_42 = arith.constant 0 : index
      %c0_43 = arith.constant 0 : index
      %64 = vector.load %arg8[%c0_42, %c0_43] : memref<3x1xf32, #tpu.memory_space<vmem>>, vector<3x1xf32>
      %65 = vector.broadcast %64 : vector<3x1xf32> to vector<3x8xf32>
      %66 = arith.addf %63, %65 : vector<3x8xf32>
      %c0_44 = arith.constant 0 : index
      %c0_45 = arith.constant 0 : index
      %c0_46 = arith.constant 0 : index
      %67 = vector.load %arg9[%c0_44, %c0_45, %c0_46] : memref<1x3x8xf32, #tpu.memory_space<vmem>>, vector<1x3x8xf32>
      %68 = vector.shape_cast %67 : vector<1x3x8xf32> to vector<3x8xf32>
      %69 = vector.shape_cast %66 : vector<3x8xf32> to vector<1x3x8xf32>
      tpu.vector_store %arg9[%c0_44, %c0_45, %c0_46], %69 {strides = array<i32>} : memref<1x3x8xf32, #tpu.memory_space<vmem>>, vector<1x3x8xf32>,
    } else {
    }
    return
  }
  func.func @transform_0(%arg0: i32, %arg1: i32) -> (i32, i32, i32) {
    %c0_i32 = arith.constant 0 : i32
    %c0_i32_0 = arith.constant 0 : i32
    %c0_i32_1 = arith.constant 0 : i32
    return %arg0, %c0_i32, %c0_i32_0 : i32, i32, i32
  }
  func.func @transform_1(%arg0: i32, %arg1: i32) -> (i32, i32, i32, i32) {
    %c0_i32 = arith.constant 0 : i32
    %c0_i32_0 = arith.constant 0 : i32
    %c0_i32_1 = arith.constant 0 : i32
    return %arg0, %arg1, %c0_i32, %c0_i32_0 : i32, i32, i32, i32
  }
  func.func @transform_2(%arg0: i32, %arg1: i32) -> (i32, i32, i32, i32) {
    %c0_i32 = arith.constant 0 : i32
    %c0_i32_0 = arith.constant 0 : i32
    %c0_i32_1 = arith.constant 0 : i32
    %c0_i32_2 = arith.constant 0 : i32
    return %arg0, %c0_i32, %c0_i32_0, %c0_i32_1 : i32, i32, i32, i32
  }
  func.func @transform_3(%arg0: i32, %arg1: i32) -> (i32, i32, i32) {
    %c0_i32 = arith.constant 0 : i32
    %c0_i32_0 = arith.constant 0 : i32
    %c0_i32_1 = arith.constant 0 : i32
    %c0_i32_2 = arith.constant 0 : i32
    return %c0_i32, %c0_i32_0, %c0_i32_1 : i32, i32, i32
  }
  func.func @transform_4(%arg0: i32, %arg1: i32) -> (i32, i32, i32) {
    %c0_i32 = arith.constant 0 : i32
    %c0_i32_0 = arith.constant 0 : i32
    %c0_i32_1 = arith.constant 0 : i32
    %c0_i32_2 = arith.constant 0 : i32
    return %c0_i32, %c0_i32_0, %c0_i32_1 : i32, i32, i32
  }
  func.func @transform_5(%arg0: i32, %arg1: i32) -> (i32, i32, i32) {
    %c0_i32 = arith.constant 0 : i32
    %c0_i32_0 = arith.constant 0 : i32
    %c0_i32_1 = arith.constant 0 : i32
    %c0_i32_2 = arith.constant 0 : i32
    return %c0_i32, %c0_i32_0, %c0_i32_1 : i32, i32, i32
  }
  func.func @transform_6(%arg0: i32, %arg1: i32) -> (i32, i32) {
    %c0_i32 = arith.constant 0 : i32
    %c0_i32_0 = arith.constant 0 : i32
    %c0_i32_1 = arith.constant 0 : i32
    return %c0_i32, %c0_i32_0 : i32, i32
  }
  func.func @transform_7(%arg0: i32, %arg1: i32) -> (i32, i32, i32) {
    %c0_i32 = arith.constant 0 : i32
    %c0_i32_0 = arith.constant 0 : i32
    %c0_i32_1 = arith.constant 0 : i32
    return %arg0, %c0_i32, %c0_i32_0 : i32, i32, i32
  }
}

</mosaic_0001>

<llo_original>
// kernel: tpu_custom_call.1
$region0: #{tpu_custom_call.1}
  #allocation0 [shape = 'u32[]', space=smem, size = 0x4, offset = 0x4, fixed_abs, tag = 'smem constant byte address 0x4 - core index']
  #allocation1 [shape = 'u32[144,128]{1,0:T(1,128)}', space=vmem, size = 0x12000, scoped, tag = 'internal scratch']
  %s0 = inlined_call_operand.vmem [shape: f32[2,8,32], index: 0, kind: input, shape index: {}]
  %s1 = inlined_call_operand.vmem [shape: f32[2,4,8,8], index: 1, kind: input, shape index: {}]
  %s2 = inlined_call_operand.vmem [shape: f32[2,3,8,8], index: 2, kind: input, shape index: {}]
  %s3 = inlined_call_operand.vmem [shape: f32[4,32,24], index: 3, kind: input, shape index: {}]
  %s4 = inlined_call_operand.vmem [shape: f32[4,1,24], index: 4, kind: input, shape index: {}]
  %s5 = inlined_call_operand.vmem [shape: f32[4,3,8], index: 5, kind: input, shape index: {}]
  %s6 = inlined_call_operand.vmem [shape: f32[3,1], index: 6, kind: input, shape index: {}]
  %s7 = inlined_call_operand.vmem [shape: f32[2,3,8], index: 7, kind: output, shape index: {}]
  %s8 = sld [smem:[#allocation0]]
  $region69: #{tpu_custom_call.1} parent=0
    _
  %s10 = ssub.s32 1, %s8
  %s11 = scalar_select 0, %s10, %s8
  loop: start=0, step=1, limit=10
  $region2: #{tpu_custom_call.1} parent=0 // loop_pre_header
    _
  $region3: #{tpu_custom_call.1} parent=0 // loop_header
    %s13 = sphi 0, %s17
    %p14 = scmp.ge.s32.totalorder %s13, 10
    %s20 = sphi 0, %s32
    %s21 = sphi 0, %s28
    %s22 = sphi 0, %s20
    %s23 = sphi 0, %s21
    %s24 = sphi 0, %s22
    %s25 = sphi 0, %s23
    %s35 = sphi 0, %s37
    %s38 = sphi 0, %s35
    %s39 = sphi 0, %s38
    %s55 = sphi 0, %s39
    %s63 = sphi 0, %s65
    %s66 = sphi 0, %s63
    %s67 = sphi 0, %s66
    %s83 = sphi 0, %s67
    %s89 = sphi 0, %s91
    %s92 = sphi 0, %s89
    %s93 = sphi 0, %s92
    %s109 = sphi 0, %s93
    %s113 = sphi 0, %s113
    %s115 = sphi 0, %s113
    %s116 = sphi 0, %s115
    %s130 = sphi 0, %s116
    %s134 = sphi 0, %s134
    %s136 = sphi 0, %s134
    %s137 = sphi 0, %s136
    %s151 = sphi 0, %s137
    %s155 = sphi 0, %s155
    %s157 = sphi 0, %s155
    %s158 = sphi 0, %s157
    %s172 = sphi 0, %s158
    %s176 = sphi 0, %s176
    %s178 = sphi 0, %s176
    %s179 = sphi 0, %s178
    %s193 = sphi 0, %s179
    %s199 = sphi 0, %s201
    %s202 = sphi 0, %s199
    %s203 = sphi 0, %s202
    %s219 = sphi 0, %s203
  $region4: #{tpu_custom_call.1} parent=0 // loop_header_branch
    %16 = sbr.rel (%p14) target = $region8
  $region5: #{tpu_custom_call.1} parent=0 // loop_body
    %s18 = ssub.s32 %s13, 1
    %s19 = ssub.s32 %s13, 2
    %s26 = sadd.s32 1, %s21
    %p27 = scmp.ge.s32.totalorder %s26, 4
    %s28 = scalar_select %p27, 0, %s26
    %s29 = sadd.s32 1, %s20
    %s30 = scalar_select %p27, %s29, %s20
    %p31 = scmp.ge.s32.totalorder %s30, 2
    %s32 = scalar_select %p31, 0, %s30
    %s33 = ssub.s32 %s20, %s32
    %p34 = scmp.eq.s32.totalorder %s33, 0
    %s36 = sadd.s32 %s35, 1
    %s37 = scalar_select %p34, %s35, %s36
    %p40 = pneg %p34
    %p41 = scmp.eq.s32.totalorder %s13, 7
    %p42 = por %p40, %p41
    %p43 = scmp.ne.s32.totalorder %s35, %s38
    %p44 = scmp.eq.s32.totalorder %s13, 0
    %p45 = por %p43, %p44
    %p46 = scmp.ne.s32.totalorder %s35, %s38
    %p47 = scmp.eq.s32.totalorder %s18, 7
    %p48 = por %p46, %p47
    %p49 = scmp.ne.s32.totalorder %s38, %s39
    %p50 = scmp.eq.s32.totalorder %s18, 0
    %p51 = por %p49, %p50
    %p52 = scmp.ne.s32.totalorder %s38, %s39
    %p53 = scmp.eq.s32.totalorder %s19, 7
    %p54 = por %p52, %p53
    %p56 = scmp.ne.s32.totalorder %s39, %s55
    %p57 = scmp.eq.s32.totalorder %s19, 0
    %p58 = por %p56, %p57
    %s59 = ssub.s32 %s20, %s32
    %s60 = ssub.s32 %s21, %s28
    %s61 = sor.u32 %s59, %s60
    %p62 = scmp.eq.s32.totalorder %s61, 0
    %s64 = sadd.s32 %s63, 1
    %s65 = scalar_select %p62, %s63, %s64
    %p68 = pneg %p62
    %p69 = scmp.eq.s32.totalorder %s13, 7
    %p70 = por %p68, %p69
    %p71 = scmp.ne.s32.totalorder %s63, %s66
    %p72 = scmp.eq.s32.totalorder %s13, 0
    %p73 = por %p71, %p72
    %p74 = scmp.ne.s32.totalorder %s63, %s66
    %p75 = scmp.eq.s32.totalorder %s18, 7
    %p76 = por %p74, %p75
    %p77 = scmp.ne.s32.totalorder %s66, %s67
    %p78 = scmp.eq.s32.totalorder %s18, 0
    %p79 = por %p77, %p78
    %p80 = scmp.ne.s32.totalorder %s66, %s67
    %p81 = scmp.eq.s32.totalorder %s19, 7
    %p82 = por %p80, %p81
    %p84 = scmp.ne.s32.totalorder %s67, %s83
    %p85 = scmp.eq.s32.totalorder %s19, 0
    %p86 = por %p84, %p85
    %s87 = ssub.s32 %s20, %s32
    %p88 = scmp.eq.s32.totalorder %s87, 0
    %s90 = sadd.s32 %s89, 1
    %s91 = scalar_select %p88, %s89, %s90
    %p94 = pneg %p88
    %p95 = scmp.eq.s32.totalorder %s13, 7
    %p96 = por %p94, %p95
    %p97 = scmp.ne.s32.totalorder %s89, %s92
    %p98 = scmp.eq.s32.totalorder %s13, 0
    %p99 = por %p97, %p98
    %p100 = scmp.ne.s32.totalorder %s89, %s92
    %p101 = scmp.eq.s32.totalorder %s18, 7
    %p102 = por %p100, %p101
    %p103 = scmp.ne.s32.totalorder %s92, %s93
    %p104 = scmp.eq.s32.totalorder %s18, 0
    %p105 = por %p103, %p104
    %p106 = scmp.ne.s32.totalorder %s92, %s93
    %p107 = scmp.eq.s32.totalorder %s19, 7
    %p108 = por %p106, %p107
    %p110 = scmp.ne.s32.totalorder %s93, %s109
    %p111 = scmp.eq.s32.totalorder %s19, 0
    %p112 = por %p110, %p111
    %s114 = sadd.s32 %s113, 1
    %p117 = scmp.eq.s32.totalorder %s13, 7
    %p118 = scmp.ne.s32.totalorder %s113, %s115
    %p119 = scmp.eq.s32.totalorder %s13, 0
    %p120 = por %p118, %p119
    %p121 = scmp.ne.s32.totalorder %s113, %s115
    %p122 = scmp.eq.s32.totalorder %s18, 7
    %p123 = por %p121, %p122
    %p124 = scmp.ne.s32.totalorder %s115, %s116
    %p125 = scmp.eq.s32.totalorder %s18, 0
    %p126 = por %p124, %p125
    %p127 = scmp.ne.s32.totalorder %s115, %s116
    %p128 = scmp.eq.s32.totalorder %s19, 7
    %p129 = por %p127, %p128
    %p131 = scmp.ne.s32.totalorder %s116, %s130
    %p132 = scmp.eq.s32.totalorder %s19, 0
    %p133 = por %p131, %p132
    %s135 = sadd.s32 %s134, 1
    %p138 = scmp.eq.s32.totalorder %s13, 7
    %p139 = scmp.ne.s32.totalorder %s134, %s136
    %p140 = scmp.eq.s32.totalorder %s13, 0
    %p141 = por %p139, %p140
    %p142 = scmp.ne.s32.totalorder %s134, %s136
    %p143 = scmp.eq.s32.totalorder %s18, 7
    %p144 = por %p142, %p143
    %p145 = scmp.ne.s32.totalorder %s136, %s137
    %p146 = scmp.eq.s32.totalorder %s18, 0
    %p147 = por %p145, %p146
    %p148 = scmp.ne.s32.totalorder %s136, %s137
    %p149 = scmp.eq.s32.totalorder %s19, 7
    %p150 = por %p148, %p149
    %p152 = scmp.ne.s32.totalorder %s137, %s151
    %p153 = scmp.eq.s32.totalorder %s19, 0
    %p154 = por %p152, %p153
    %s156 = sadd.s32 %s155, 1
    %p159 = scmp.eq.s32.totalorder %s13, 7
    %p160 = scmp.ne.s32.totalorder %s155, %s157
    %p161 = scmp.eq.s32.totalorder %s13, 0
    %p162 = por %p160, %p161
    %p163 = scmp.ne.s32.totalorder %s155, %s157
    %p164 = scmp.eq.s32.totalorder %s18, 7
    %p165 = por %p163, %p164
    %p166 = scmp.ne.s32.totalorder %s157, %s158
    %p167 = scmp.eq.s32.totalorder %s18, 0
    %p168 = por %p166, %p167
    %p169 = scmp.ne.s32.totalorder %s157, %s158
    %p170 = scmp.eq.s32.totalorder %s19, 7
    %p171 = por %p169, %p170
    %p173 = scmp.ne.s32.totalorder %s158, %s172
    %p174 = scmp.eq.s32.totalorder %s19, 0
    %p175 = por %p173, %p174
    %s177 = sadd.s32 %s176, 1
    %p180 = scmp.eq.s32.totalorder %s13, 7
    %p181 = scmp.ne.s32.totalorder %s176, %s178
    %p182 = scmp.eq.s32.totalorder %s13, 0
    %p183 = por %p181, %p182
    %p184 = scmp.ne.s32.totalorder %s176, %s178
    %p185 = scmp.eq.s32.totalorder %s18, 7
    %p186 = por %p184, %p185
    %p187 = scmp.ne.s32.totalorder %s178, %s179
    %p188 = scmp.eq.s32.totalorder %s18, 0
    %p189 = por %p187, %p188
    %p190 = scmp.ne.s32.totalorder %s178, %s179
    %p191 = scmp.eq.s32.totalorder %s19, 7
    %p192 = por %p190, %p191
    %p194 = scmp.ne.s32.totalorder %s179, %s193
    %p195 = scmp.eq.s32.totalorder %s19, 0
    %p196 = por %p194, %p195
    %s197 = ssub.s32 %s20, %s32
    %p198 = scmp.eq.s32.totalorder %s197, 0
    %s200 = sadd.s32 %s199, 1
    %s201 = scalar_select %p198, %s199, %s200
    %p204 = pneg %p198
    %p205 = scmp.eq.s32.totalorder %s13, 7
    %p206 = por %p204, %p205
    %p207 = scmp.ne.s32.totalorder %s199, %s202
    %p208 = scmp.eq.s32.totalorder %s13, 0
    %p209 = por %p207, %p208
    %p210 = scmp.ne.s32.totalorder %s199, %s202
    %p211 = scmp.eq.s32.totalorder %s18, 7
    %p212 = por %p210, %p211
    %p213 = scmp.ne.s32.totalorder %s202, %s203
    %p214 = scmp.eq.s32.totalorder %s18, 0
    %p215 = por %p213, %p214
    %p216 = scmp.ne.s32.totalorder %s202, %s203
    %p217 = scmp.eq.s32.totalorder %s19, 7
    %p218 = por %p216, %p217
    %p220 = scmp.ne.s32.totalorder %s203, %s219
    %p221 = scmp.eq.s32.totalorder %s19, 0
    %p222 = por %p220, %p221
    %p223 = scmp.le.s32.totalorder 1, %s13
    %p224 = scmp.lt.s32.totalorder %s13, 9
    %p225 = pnand %p223, %p224
    %p226 = pneg %p225
    // Predicated region
    $region9: #{tpu_custom_call.1} parent=5 // pred_check
      _
    $region10: #{tpu_custom_call.1} parent=5 // pred_check_branch
      %228 = sbr.rel (%p225) target = $region12
    $region11: #{tpu_custom_call.1} parent=5 // pred_region
      %s229 = ssub.s32 %s13, 1
      // Predicated region
      $region13: #{tpu_custom_call.1} parent=11 // pred_check
        %p230 = pneg %p126
      $region14: #{tpu_custom_call.1} parent=11 // pred_check_branch
        %232 = sbr.rel (%p230) target = $region16
      $region15: #{tpu_custom_call.1} parent=11 // pred_region
        _
      $region16: #{tpu_custom_call.1} parent=11 // pred_fallthru
        _
      // Predicated region
      $region17: #{tpu_custom_call.1} parent=11 // pred_check
        %p233 = pneg %p147
      $region18: #{tpu_custom_call.1} parent=11 // pred_check_branch
        %235 = sbr.rel (%p233) target = $region20
      $region19: #{tpu_custom_call.1} parent=11 // pred_region
        _
      $region20: #{tpu_custom_call.1} parent=11 // pred_fallthru
        _
      // Predicated region
      $region21: #{tpu_custom_call.1} parent=11 // pred_check
        %p236 = pneg %p168
      $region22: #{tpu_custom_call.1} parent=11 // pred_check_branch
        %238 = sbr.rel (%p236) target = $region24
      $region23: #{tpu_custom_call.1} parent=11 // pred_region
        _
      $region24: #{tpu_custom_call.1} parent=11 // pred_fallthru
        _
      // Predicated region
      $region25: #{tpu_custom_call.1} parent=11 // pred_check
        %p239 = pneg %p189
      $region26: #{tpu_custom_call.1} parent=11 // pred_check_branch
        %241 = sbr.rel (%p239) target = $region28
      $region27: #{tpu_custom_call.1} parent=11 // pred_region
        _
      $region28: #{tpu_custom_call.1} parent=11 // pred_fallthru
        _
    $region12: #{tpu_custom_call.1} parent=5 // pred_fallthru
      _
    %p242 = scmp.lt.s32.totalorder %s13, 8
    // Predicated region
    $region29: #{tpu_custom_call.1} parent=5 // pred_check
      %p243 = pneg %p242
    $region30: #{tpu_custom_call.1} parent=5 // pred_check_branch
      %245 = sbr.rel (%p243) target = $region32
    $region31: #{tpu_custom_call.1} parent=5 // pred_region
      // Predicated region
      $region33: #{tpu_custom_call.1} parent=31 // pred_check
        %p246 = pneg %p45
      $region34: #{tpu_custom_call.1} parent=31 // pred_check_branch
        %248 = sbr.rel (%p246) target = $region36
      $region35: #{tpu_custom_call.1} parent=31 // pred_region
        %p249 = scmp.lt.s32.totalorder %s20, 1
        %s250 = scalar_select %p249, %s20, 1
        %s251 = smul.addr %s250, 8
        %s252 = scalar_lea.vmem %s0, %s251
      $region36: #{tpu_custom_call.1} parent=31 // pred_fallthru
        _
      // Predicated region
      $region37: #{tpu_custom_call.1} parent=31 // pred_check
        %p253 = pneg %p73
      $region38: #{tpu_custom_call.1} parent=31 // pred_check_branch
        %255 = sbr.rel (%p253) target = $region40
      $region39: #{tpu_custom_call.1} parent=31 // pred_region
        %p256 = scmp.lt.s32.totalorder %s20, 1
        %s257 = scalar_select %p256, %s20, 1
        %p258 = scmp.lt.s32.totalorder %s21, 3
        %s259 = scalar_select %p258, %s21, 3
        %s260 = smul.addr %s257, 4
        %s261 = sadd.s32 %s259, %s260
        %s262 = smul.addr %s261, 8
        %s263 = scalar_lea.vmem %s1, %s262
      $region40: #{tpu_custom_call.1} parent=31 // pred_fallthru
        _
      // Predicated region
      $region41: #{tpu_custom_call.1} parent=31 // pred_check
        %p264 = pneg %p99
      $region42: #{tpu_custom_call.1} parent=31 // pred_check_branch
        %266 = sbr.rel (%p264) target = $region44
      $region43: #{tpu_custom_call.1} parent=31 // pred_region
        %p267 = scmp.lt.s32.totalorder %s20, 1
        %s268 = scalar_select %p267, %s20, 1
        %s269 = smul.addr %s268, 3
        %s270 = smul.addr %s269, 8
        %s271 = scalar_lea.vmem %s2, %s270
      $region44: #{tpu_custom_call.1} parent=31 // pred_fallthru
        _
    $region32: #{tpu_custom_call.1} parent=5 // pred_fallthru
      _
    %p272 = scmp.le.s32.totalorder 1, %s13
    %p273 = scmp.lt.s32.totalorder %s13, 9
    %p274 = pnand %p272, %p273
    %p275 = pneg %p274
    // Predicated region
    $region45: #{tpu_custom_call.1} parent=5 // pred_check
      _
    $region46: #{tpu_custom_call.1} parent=5 // pred_check_branch
      %277 = sbr.rel (%p274) target = $region48
    $region47: #{tpu_custom_call.1} parent=5 // pred_region
      %s278 = ssub.s32 %s13, 1
      %p279 = scmp.lt.s32.totalorder %s22, 1
      %s280 = scalar_select %p279, %s22, 1
      %s281 = smul.addr %s280, 8
      %s282 = scalar_lea.vmem %s0, %s281
      %p283 = pneg %p51
      %p284 = pneg %p48
      %p285 = scmp.lt.s32.totalorder %s22, 1
      %s286 = scalar_select %p285, %s22, 1
      %p287 = scmp.lt.s32.totalorder %s23, 3
      %s288 = scalar_select %p287, %s23, 3
      %s289 = smul.addr %s286, 4
      %s290 = sadd.s32 %s288, %s289
      %s291 = smul.addr %s290, 8
      %s292 = scalar_lea.vmem %s1, %s291
      %p293 = pneg %p79
      %p294 = pneg %p76
      %p295 = scmp.lt.s32.totalorder %s22, 1
      %s296 = scalar_select %p295, %s22, 1
      %s297 = smul.addr %s296, 3
      %s298 = smul.addr %s297, 8
      %s299 = scalar_lea.vmem %s2, %s298
      %p300 = pneg %p105
      %p301 = pneg %p102
      %p302 = pneg %p126
      %p303 = pneg %p123
      %p304 = pneg %p147
      %p305 = pneg %p144
      %p306 = pneg %p168
      %p307 = pneg %p165
      %p308 = pneg %p189
      %p309 = pneg %p186
      %p310 = pneg %p215
      %p311 = pneg %p212
      %p312 = scmp.lt.s32.totalorder %s22, 1
      %s313 = scalar_select %p312, %s22, 1
      %s314 = smul.addr %s313, 4
      %s315 = scalar_lea.vmem %s7, %s314
      %p316 = scmp.lt.s32.totalorder %s22, 1
      %s317 = scalar_select %p316, %s22, 1
      %s318 = smul.addr %s317, 8
      %s319 = scalar_lea.vmem %s0, %s318
      %p320 = scmp.lt.s32.totalorder %s22, 1
      %s321 = scalar_select %p320, %s22, 1
      %p322 = scmp.lt.s32.totalorder %s23, 3
      %s323 = scalar_select %p322, %s23, 3
      %s324 = smul.addr %s321, 4
      %s325 = sadd.s32 %s323, %s324
      %s326 = smul.addr %s325, 8
      %s327 = scalar_lea.vmem %s1, %s326
      %p328 = scmp.lt.s32.totalorder %s22, 1
      %s329 = scalar_select %p328, %s22, 1
      %s330 = smul.addr %s329, 3
      %s331 = smul.addr %s330, 8
      %s332 = scalar_lea.vmem %s2, %s331
      %p333 = scmp.lt.s32.totalorder %s22, 1
      %s334 = scalar_select %p333, %s22, 1
      %s335 = smul.addr %s334, 4
      %s336 = scalar_lea.vmem %s7, %s335
      %p337 = scmp.eq.s32.totalorder %s23, 0
      // Predicated region
      $region49: #{tpu_custom_call.1} parent=47 // pred_check
        %p338 = pneg %p337
      $region50: #{tpu_custom_call.1} parent=47 // pred_check_branch
        %340 = sbr.rel (%p338) target = $region52
      $region51: #{tpu_custom_call.1} parent=47 // pred_region
        %vm341 = vcmask 59392
        %342 = vst.msk [vmem:[%s336] sm:$0x7] %vm341, 0.0
      $region52: #{tpu_custom_call.1} parent=47 // pred_fallthru
        _
      %v343 = vld [vmem:[%s319] sm:$0xff]
      %s344 = smul.u32 %s23, 32
      %s345 = scalar_lea.vmem %s3, %s344
      %v346 = vld [vmem:[%s345] sm:$0xff]
      %v347 = vld [vmem:[%s345 + $0x8] sm:$0xff]
      %v348 = vld [vmem:[%s345 + $0x10] sm:$0xff]
      %v349 = vld [vmem:[%s345 + $0x18] sm:$0xff]
      %s350 = scalar_lea.vmem %s4, %s23
      %v351 = vld [vmem:[%s350] sm:$0x1]
      %v353 = vlaneseq
      %v354 = vshrl.u32 %v353, 7
      %v355 = vsub.s32 0, %v354
      %v356 = vrot.slane %v351, %v355
      %vm358 = vcmask 261120
      %v360 = vsel %vm358, %v343, 0
      %362 = vmatprep.subr.mxu0 0.0
      %363 = vmatpush1.msra.mxu0 %v346
      %364 = vmatprep.subr.mxu0 0.0
      %365 = vmatpush1.msra.mxu0 %v347
      %366 = vmatprep.subr.mxu0 0.0
      %367 = vmatpush1.msra.mxu0 %v348
      %368 = vmatprep.subr.mxu0 0.0
      %369 = vmatpush1.msra.mxu0 %v349
      %370 = vmatprep.subr.mxu0 0.0
      %371 = vmatpush1.msra.mxu0 0.0
      %372 = vmatprep.subr.mxu0 0.0
      %373 = vmatpush1.msra.mxu0 0.0
      %374 = vmatprep.subr.mxu0 0.0
      %375 = vmatpush1.msra.mxu0 0.0
      %376 = vmatprep.subr.mxu0 0.0
      %377 = vmatpush1.msra.mxu0 0.0
      %378 = vmatprep.subr.mxu0 0.0
      %379 = vmatpush1.msra.mxu0 0.0
      %380 = vmatprep.subr.mxu0 0.0
      %381 = vmatpush1.msra.mxu0 0.0
      %382 = vmatprep.subr.mxu0 0.0
      %383 = vmatpush1.msra.mxu0 0.0
      %384 = vmatprep.subr.mxu0 0.0
      %385 = vmatpush1.msra.mxu0 0.0
      %386 = vmatprep.subr.mxu0 0.0
      %387 = vmatpush1.msra.mxu0 0.0
      %388 = vmatprep.subr.mxu0 0.0
      %389 = vmatpush1.msra.mxu0 0.0
      %390 = vmatprep.subr.mxu0 0.0
      %391 = vmatpush1.msra.mxu0 0.0
      %392 = vmatprep.subr.mxu0 0.0
      %393 = vmatpush1.msra.mxu0 0.0
      %394 = vmatprep.subr.mxu0 0.0
      %395 = vmatpush1.msra.mxu0 0.0
      %396 = vmatprep.subr.mxu0 0.0
      %397 = vmatpush1.msra.mxu0 0.0
      %398 = vmatprep.subr.mxu0 0.0
      %399 = vmatpush1.msra.mxu0 0.0
      %400 = vmatprep.subr.mxu0 0.0
      %401 = vmatpush1.msra.mxu0 0.0
      %402 = vmatprep.subr.mxu0 0.0
      %403 = vmatpush1.msra.mxu0 0.0
      %404 = vmatprep.subr.mxu0 0.0
      %405 = vmatpush1.msra.mxu0 0.0
      %406 = vmatprep.subr.mxu0 0.0
      %407 = vmatpush1.msra.mxu0 0.0
      %408 = vmatprep.subr.mxu0 0.0
      %409 = vmatpush1.msra.mxu0 0.0
      %410 = vmatprep.subr.mxu0 0.0
      %411 = vmatpush1.msra.mxu0 0.0
      %412 = vmatprep.subr.mxu0 0.0
      %413 = vmatpush1.msra.mxu0 0.0
      %414 = vmatprep.subr.mxu0 0.0
      %415 = vmatpush1.msra.mxu0 0.0
      %416 = vmatprep.subr.mxu0 0.0
      %417 = vmatpush1.msra.mxu0 0.0
      %418 = vmatprep.subr.mxu0 0.0
      %419 = vmatpush1.msra.mxu0 0.0
      %420 = vmatprep.subr.mxu0 0.0
      %421 = vmatpush1.msra.mxu0 0.0
      %422 = vmatprep.subr.mxu0 0.0
      %423 = vmatpush1.msra.mxu0 0.0
      %424 = vmatprep.subr.mxu0 0.0
      %425 = vmatpush1.msra.mxu0 0.0
      %426 = vmatprep.mubr.f32.mxu0 0.0
      %427 = vmatmul.mubr.f32.gmra.mrb[0].mxu0 %v360
      %v428 = vpop.f32.mrb[0].mxu0
      %v429 = vadd.f32 %v356, %v428
      %v430 = vpop.f32.mrb[0].mxu0
      %431 = vdwg.mxu0
      %v432 = vmul.f32 %v429, 0.35355338
      %v433 = vld [vmem:[%s327] sm:$0xff]
      %435 = vrot.lane.b32.xlu0 %v429, 120
      %v436 = vpop.permute.xlu0 %435
      %vm437 = vcmask 64512
      %v439 = vsel %vm437, %v432, 0
      %v441 = vsel %vm437, %v436, 0
      %443 = vmatprep.subr.mxu0 0.0
      %444 = vmatpush1.xpose.msra.mxu0 %v441
      %445 = vmatprep.subr.mxu0 0.0
      %446 = vmatpush1.xpose.msra.mxu0 0.0
      %447 = vmatprep.subr.mxu0 0.0
      %448 = vmatpush1.xpose.msra.mxu0 0.0
      %449 = vmatprep.subr.mxu0 0.0
      %450 = vmatpush1.xpose.msra.mxu0 0.0
      %451 = vmatprep.subr.mxu0 0.0
      %452 = vmatpush1.xpose.msra.mxu0 0.0
      %453 = vmatprep.subr.mxu0 0.0
      %454 = vmatpush1.xpose.msra.mxu0 0.0
      %455 = vmatprep.subr.mxu0 0.0
      %456 = vmatpush1.xpose.msra.mxu0 0.0
      %457 = vmatprep.subr.mxu0 0.0
      %458 = vmatpush1.xpose.msra.mxu0 0.0
      %459 = vmatprep.subr.mxu0 0.0
      %460 = vmatpush1.xpose.msra.mxu0 0.0
      %461 = vmatprep.subr.mxu0 0.0
      %462 = vmatpush1.xpose.msra.mxu0 0.0
      %463 = vmatprep.subr.mxu0 0.0
      %464 = vmatpush1.xpose.msra.mxu0 0.0
      %465 = vmatprep.subr.mxu0 0.0
      %466 = vmatpush1.xpose.msra.mxu0 0.0
      %467 = vmatprep.subr.mxu0 0.0
      %468 = vmatpush1.xpose.msra.mxu0 0.0
      %469 = vmatprep.subr.mxu0 0.0
      %470 = vmatpush1.xpose.msra.mxu0 0.0
      %471 = vmatprep.subr.mxu0 0.0
      %472 = vmatpush1.xpose.msra.mxu0 0.0
      %473 = vmatprep.subr.mxu0 0.0
      %474 = vmatpush1.xpose.msra.mxu0 0.0
      %475 = vmatprep.subr.mxu0 0.0
      %476 = vmatpush1.xpose.msra.mxu0 0.0
      %477 = vmatprep.subr.mxu0 0.0
      %478 = vmatpush1.xpose.msra.mxu0 0.0
      %479 = vmatprep.subr.mxu0 0.0
      %480 = vmatpush1.xpose.msra.mxu0 0.0
      %481 = vmatprep.subr.mxu0 0.0
      %482 = vmatpush1.xpose.msra.mxu0 0.0
      %483 = vmatprep.subr.mxu0 0.0
      %484 = vmatpush1.xpose.msra.mxu0 0.0
      %485 = vmatprep.subr.mxu0 0.0
      %486 = vmatpush1.xpose.msra.mxu0 0.0
      %487 = vmatprep.subr.mxu0 0.0
      %488 = vmatpush1.xpose.msra.mxu0 0.0
      %489 = vmatprep.subr.mxu0 0.0
      %490 = vmatpush1.xpose.msra.mxu0 0.0
      %491 = vmatprep.subr.mxu0 0.0
      %492 = vmatpush1.xpose.msra.mxu0 0.0
      %493 = vmatprep.subr.mxu0 0.0
      %494 = vmatpush1.xpose.msra.mxu0 0.0
      %495 = vmatprep.subr.mxu0 0.0
      %496 = vmatpush1.xpose.msra.mxu0 0.0
      %497 = vmatprep.subr.mxu0 0.0
      %498 = vmatpush1.xpose.msra.mxu0 0.0
      %499 = vmatprep.subr.mxu0 0.0
      %500 = vmatpush1.xpose.msra.mxu0 0.0
      %501 = vmatprep.subr.mxu0 0.0
      %502 = vmatpush1.xpose.msra.mxu0 0.0
      %503 = vmatprep.subr.mxu0 0.0
      %504 = vmatpush1.xpose.msra.mxu0 0.0
      %505 = vmatprep.subr.mxu0 0.0
      %506 = vmatpush1.xpose.msra.mxu0 0.0
      %507 = vmatprep.mubr.f32.mxu0 0.0
      %508 = vmatmul.mubr.f32.gmra.mrb[0].mxu0 %v439
      %v509 = vpop.f32.mrb[0].mxu0
      %v510 = vadd.f32 %v433, %v509
      %v511 = vpop.f32.mrb[0].mxu0
      %512 = vdwg.mxu0
      %v513 = vsel %vm437, %v510, -inf
      %514 = vmax.xlane.f32.xlu0 %v513
      %v515 = vpop.xlane.xlu0 %514
      %v516 = vsub.f32 %v510, %v515
      %v517 = vmul.f32 %v516, 1.442695
      %v518 = vpow.pop %v517
      %v520 = vsel %vm437, 1.0, 0
      %v523 = vsel %vm437, %v518, 0
      %525 = vmatprep.subr.mxu0 0.0
      %526 = vmatpush1.xpose.msra.mxu0 %v523
      %527 = vmatprep.subr.mxu0 0.0
      %528 = vmatpush1.xpose.msra.mxu0 0.0
      %529 = vmatprep.subr.mxu0 0.0
      %530 = vmatpush1.xpose.msra.mxu0 0.0
      %531 = vmatprep.subr.mxu0 0.0
      %532 = vmatpush1.xpose.msra.mxu0 0.0
      %533 = vmatprep.subr.mxu0 0.0
      %534 = vmatpush1.xpose.msra.mxu0 0.0
      %535 = vmatprep.subr.mxu0 0.0
      %536 = vmatpush1.xpose.msra.mxu0 0.0
      %537 = vmatprep.subr.mxu0 0.0
      %538 = vmatpush1.xpose.msra.mxu0 0.0
      %539 = vmatprep.subr.mxu0 0.0
      %540 = vmatpush1.xpose.msra.mxu0 0.0
      %541 = vmatprep.subr.mxu0 0.0
      %542 = vmatpush1.xpose.msra.mxu0 0.0
      %543 = vmatprep.subr.mxu0 0.0
      %544 = vmatpush1.xpose.msra.mxu0 0.0
      %545 = vmatprep.subr.mxu0 0.0
      %546 = vmatpush1.xpose.msra.mxu0 0.0
      %547 = vmatprep.subr.mxu0 0.0
      %548 = vmatpush1.xpose.msra.mxu0 0.0
      %549 = vmatprep.subr.mxu0 0.0
      %550 = vmatpush1.xpose.msra.mxu0 0.0
      %551 = vmatprep.subr.mxu0 0.0
      %552 = vmatpush1.xpose.msra.mxu0 0.0
      %553 = vmatprep.subr.mxu0 0.0
      %554 = vmatpush1.xpose.msra.mxu0 0.0
      %555 = vmatprep.subr.mxu0 0.0
      %556 = vmatpush1.xpose.msra.mxu0 0.0
      %557 = vmatprep.subr.mxu0 0.0
      %558 = vmatpush1.xpose.msra.mxu0 0.0
      %559 = vmatprep.subr.mxu0 0.0
      %560 = vmatpush1.xpose.msra.mxu0 0.0
      %561 = vmatprep.subr.mxu0 0.0
      %562 = vmatpush1.xpose.msra.mxu0 0.0
      %563 = vmatprep.subr.mxu0 0.0
      %564 = vmatpush1.xpose.msra.mxu0 0.0
      %565 = vmatprep.subr.mxu0 0.0
      %566 = vmatpush1.xpose.msra.mxu0 0.0
      %567 = vmatprep.subr.mxu0 0.0
      %568 = vmatpush1.xpose.msra.mxu0 0.0
      %569 = vmatprep.subr.mxu0 0.0
      %570 = vmatpush1.xpose.msra.mxu0 0.0
      %571 = vmatprep.subr.mxu0 0.0
      %572 = vmatpush1.xpose.msra.mxu0 0.0
      %573 = vmatprep.subr.mxu0 0.0
      %574 = vmatpush1.xpose.msra.mxu0 0.0
      %575 = vmatprep.subr.mxu0 0.0
      %576 = vmatpush1.xpose.msra.mxu0 0.0
      %577 = vmatprep.subr.mxu0 0.0
      %578 = vmatpush1.xpose.msra.mxu0 0.0
      %579 = vmatprep.subr.mxu0 0.0
      %580 = vmatpush1.xpose.msra.mxu0 0.0
      %581 = vmatprep.subr.mxu0 0.0
      %582 = vmatpush1.xpose.msra.mxu0 0.0
      %583 = vmatprep.subr.mxu0 0.0
      %584 = vmatpush1.xpose.msra.mxu0 0.0
      %585 = vmatprep.subr.mxu0 0.0
      %586 = vmatpush1.xpose.msra.mxu0 0.0
      %587 = vmatprep.subr.mxu0 0.0
      %588 = vmatpush1.xpose.msra.mxu0 0.0
      %589 = vmatprep.mubr.f32.mxu0 0.0
      %590 = vmatmul.mubr.f32.gmra.mrb[0].mxu0 %v520
      %v591 = vpop.f32.mrb[0].mxu0
      %v592 = vadd.f32 0.0, %v591
      %v593 = vpop.f32.mrb[0].mxu0
      %594 = vdwg.mxu0
      %v595 = vrcp.pop %v592
      %s596 = smul.u32 %s23, 4
      %s597 = scalar_lea.vmem %s5, %s596
      %v598 = vld [vmem:[%s597] sm:$0x7]
      %599 = vrot.lane.b32.xlu0 %v429, 112
      %v600 = vpop.permute.xlu0 %599
      %v602 = vsel %vm437, %v598, 0
      %v604 = vsel %vm437, %v600, 0
      %606 = vmatprep.subr.mxu0 0.0
      %607 = vmatpush1.xpose.msra.mxu0 %v604
      %608 = vmatprep.subr.mxu0 0.0
      %609 = vmatpush1.xpose.msra.mxu0 0.0
      %610 = vmatprep.subr.mxu0 0.0
      %611 = vmatpush1.xpose.msra.mxu0 0.0
      %612 = vmatprep.subr.mxu0 0.0
      %613 = vmatpush1.xpose.msra.mxu0 0.0
      %614 = vmatprep.subr.mxu0 0.0
      %615 = vmatpush1.xpose.msra.mxu0 0.0
      %616 = vmatprep.subr.mxu0 0.0
      %617 = vmatpush1.xpose.msra.mxu0 0.0
      %618 = vmatprep.subr.mxu0 0.0
      %619 = vmatpush1.xpose.msra.mxu0 0.0
      %620 = vmatprep.subr.mxu0 0.0
      %621 = vmatpush1.xpose.msra.mxu0 0.0
      %622 = vmatprep.subr.mxu0 0.0
      %623 = vmatpush1.xpose.msra.mxu0 0.0
      %624 = vmatprep.subr.mxu0 0.0
      %625 = vmatpush1.xpose.msra.mxu0 0.0
      %626 = vmatprep.subr.mxu0 0.0
      %627 = vmatpush1.xpose.msra.mxu0 0.0
      %628 = vmatprep.subr.mxu0 0.0
      %629 = vmatpush1.xpose.msra.mxu0 0.0
      %630 = vmatprep.subr.mxu0 0.0
      %631 = vmatpush1.xpose.msra.mxu0 0.0
      %632 = vmatprep.subr.mxu0 0.0
      %633 = vmatpush1.xpose.msra.mxu0 0.0
      %634 = vmatprep.subr.mxu0 0.0
      %635 = vmatpush1.xpose.msra.mxu0 0.0
      %636 = vmatprep.subr.mxu0 0.0
      %637 = vmatpush1.xpose.msra.mxu0 0.0
      %638 = vmatprep.subr.mxu0 0.0
      %639 = vmatpush1.xpose.msra.mxu0 0.0
      %640 = vmatprep.subr.mxu0 0.0
      %641 = vmatpush1.xpose.msra.mxu0 0.0
      %642 = vmatprep.subr.mxu0 0.0
      %643 = vmatpush1.xpose.msra.mxu0 0.0
      %644 = vmatprep.subr.mxu0 0.0
      %645 = vmatpush1.xpose.msra.mxu0 0.0
      %646 = vmatprep.subr.mxu0 0.0
      %647 = vmatpush1.xpose.msra.mxu0 0.0
      %648 = vmatprep.subr.mxu0 0.0
      %649 = vmatpush1.xpose.msra.mxu0 0.0
      %650 = vmatprep.subr.mxu0 0.0
      %651 = vmatpush1.xpose.msra.mxu0 0.0
      %652 = vmatprep.subr.mxu0 0.0
      %653 = vmatpush1.xpose.msra.mxu0 0.0
      %654 = vmatprep.subr.mxu0 0.0
      %655 = vmatpush1.xpose.msra.mxu0 0.0
      %656 = vmatprep.subr.mxu0 0.0
      %657 = vmatpush1.xpose.msra.mxu0 0.0
      %658 = vmatprep.subr.mxu0 0.0
      %659 = vmatpush1.xpose.msra.mxu0 0.0
      %660 = vmatprep.subr.mxu0 0.0
      %661 = vmatpush1.xpose.msra.mxu0 0.0
      %662 = vmatprep.subr.mxu0 0.0
      %663 = vmatpush1.xpose.msra.mxu0 0.0
      %664 = vmatprep.subr.mxu0 0.0
      %665 = vmatpush1.xpose.msra.mxu0 0.0
      %666 = vmatprep.subr.mxu0 0.0
      %667 = vmatpush1.xpose.msra.mxu0 0.0
      %668 = vmatprep.subr.mxu0 0.0
      %669 = vmatpush1.xpose.msra.mxu0 0.0
      %670 = vmatprep.mubr.f32.mxu0 0.0
      %671 = vmatmul.mubr.f32.gmra.mrb[0].mxu0 %v602
      %v672 = vpop.f32.mrb[0].mxu0
      %v673 = vadd.f32 0.0, %v672
      %v674 = vpop.f32.mrb[0].mxu0
      %675 = vdwg.mxu0
      %v676 = vld [vmem:[%s332] sm:$0xff]
      %v677 = vmul.f32 %v518, %v676
      %v679 = vsel %vm437, %v673, 0
      %v682 = vsel %vm437, %v677, 0
      %684 = vmatprep.subr.mxu0 0.0
      %685 = vmatpush1.xpose.msra.mxu0 %v682
      %686 = vmatprep.subr.mxu0 0.0
      %687 = vmatpush1.xpose.msra.mxu0 0.0
      %688 = vmatprep.subr.mxu0 0.0
      %689 = vmatpush1.xpose.msra.mxu0 0.0
      %690 = vmatprep.subr.mxu0 0.0
      %691 = vmatpush1.xpose.msra.mxu0 0.0
      %692 = vmatprep.subr.mxu0 0.0
      %693 = vmatpush1.xpose.msra.mxu0 0.0
      %694 = vmatprep.subr.mxu0 0.0
      %695 = vmatpush1.xpose.msra.mxu0 0.0
      %696 = vmatprep.subr.mxu0 0.0
      %697 = vmatpush1.xpose.msra.mxu0 0.0
      %698 = vmatprep.subr.mxu0 0.0
      %699 = vmatpush1.xpose.msra.mxu0 0.0
      %700 = vmatprep.subr.mxu0 0.0
      %701 = vmatpush1.xpose.msra.mxu0 0.0
      %702 = vmatprep.subr.mxu0 0.0
      %703 = vmatpush1.xpose.msra.mxu0 0.0
      %704 = vmatprep.subr.mxu0 0.0
      %705 = vmatpush1.xpose.msra.mxu0 0.0
      %706 = vmatprep.subr.mxu0 0.0
      %707 = vmatpush1.xpose.msra.mxu0 0.0
      %708 = vmatprep.subr.mxu0 0.0
      %709 = vmatpush1.xpose.msra.mxu0 0.0
      %710 = vmatprep.subr.mxu0 0.0
      %711 = vmatpush1.xpose.msra.mxu0 0.0
      %712 = vmatprep.subr.mxu0 0.0
      %713 = vmatpush1.xpose.msra.mxu0 0.0
      %714 = vmatprep.subr.mxu0 0.0
      %715 = vmatpush1.xpose.msra.mxu0 0.0
      %716 = vmatprep.subr.mxu0 0.0
      %717 = vmatpush1.xpose.msra.mxu0 0.0
      %718 = vmatprep.subr.mxu0 0.0
      %719 = vmatpush1.xpose.msra.mxu0 0.0
      %720 = vmatprep.subr.mxu0 0.0
      %721 = vmatpush1.xpose.msra.mxu0 0.0
      %722 = vmatprep.subr.mxu0 0.0
      %723 = vmatpush1.xpose.msra.mxu0 0.0
      %724 = vmatprep.subr.mxu0 0.0
      %725 = vmatpush1.xpose.msra.mxu0 0.0
      %726 = vmatprep.subr.mxu0 0.0
      %727 = vmatpush1.xpose.msra.mxu0 0.0
      %728 = vmatprep.subr.mxu0 0.0
      %729 = vmatpush1.xpose.msra.mxu0 0.0
      %730 = vmatprep.subr.mxu0 0.0
      %731 = vmatpush1.xpose.msra.mxu0 0.0
      %732 = vmatprep.subr.mxu0 0.0
      %733 = vmatpush1.xpose.msra.mxu0 0.0
      %734 = vmatprep.subr.mxu0 0.0
      %735 = vmatpush1.xpose.msra.mxu0 0.0
      %736 = vmatprep.subr.mxu0 0.0
      %737 = vmatpush1.xpose.msra.mxu0 0.0
      %738 = vmatprep.subr.mxu0 0.0
      %739 = vmatpush1.xpose.msra.mxu0 0.0
      %740 = vmatprep.subr.mxu0 0.0
      %741 = vmatpush1.xpose.msra.mxu0 0.0
      %742 = vmatprep.subr.mxu0 0.0
      %743 = vmatpush1.xpose.msra.mxu0 0.0
      %744 = vmatprep.subr.mxu0 0.0
      %745 = vmatpush1.xpose.msra.mxu0 0.0
      %746 = vmatprep.subr.mxu0 0.0
      %747 = vmatpush1.xpose.msra.mxu0 0.0
      %748 = vmatprep.mubr.f32.mxu0 0.0
      %749 = vmatmul.mubr.f32.gmra.mrb[0].mxu0 %v679
      %v750 = vpop.f32.mrb[0].mxu0
      %v751 = vadd.f32 0.0, %v750
      %v752 = vpop.f32.mrb[0].mxu0
      %753 = vdwg.mxu0
      %s754 = scalar_lea.vmem %s332, 8
      %v755 = vld [vmem:[%s754] sm:$0xff]
      %v756 = vmul.f32 %v518, %v755
      %v757 = vrot.slane %v673, 1
      %v758 = vsel %vm437, %v757, 0
      %v761 = vsel %vm437, %v756, 0
      %763 = vmatprep.subr.mxu0 0.0
      %764 = vmatpush1.xpose.msra.mxu0 %v761
      %765 = vmatprep.subr.mxu0 0.0
      %766 = vmatpush1.xpose.msra.mxu0 0.0
      %767 = vmatprep.subr.mxu0 0.0
      %768 = vmatpush1.xpose.msra.mxu0 0.0
      %769 = vmatprep.subr.mxu0 0.0
      %770 = vmatpush1.xpose.msra.mxu0 0.0
      %771 = vmatprep.subr.mxu0 0.0
      %772 = vmatpush1.xpose.msra.mxu0 0.0
      %773 = vmatprep.subr.mxu0 0.0
      %774 = vmatpush1.xpose.msra.mxu0 0.0
      %775 = vmatprep.subr.mxu0 0.0
      %776 = vmatpush1.xpose.msra.mxu0 0.0
      %777 = vmatprep.subr.mxu0 0.0
      %778 = vmatpush1.xpose.msra.mxu0 0.0
      %779 = vmatprep.subr.mxu0 0.0
      %780 = vmatpush1.xpose.msra.mxu0 0.0
      %781 = vmatprep.subr.mxu0 0.0
      %782 = vmatpush1.xpose.msra.mxu0 0.0
      %783 = vmatprep.subr.mxu0 0.0
      %784 = vmatpush1.xpose.msra.mxu0 0.0
      %785 = vmatprep.subr.mxu0 0.0
      %786 = vmatpush1.xpose.msra.mxu0 0.0
      %787 = vmatprep.subr.mxu0 0.0
      %788 = vmatpush1.xpose.msra.mxu0 0.0
      %789 = vmatprep.subr.mxu0 0.0
      %790 = vmatpush1.xpose.msra.mxu0 0.0
      %791 = vmatprep.subr.mxu0 0.0
      %792 = vmatpush1.xpose.msra.mxu0 0.0
      %793 = vmatprep.subr.mxu0 0.0
      %794 = vmatpush1.xpose.msra.mxu0 0.0
      %795 = vmatprep.subr.mxu0 0.0
      %796 = vmatpush1.xpose.msra.mxu0 0.0
      %797 = vmatprep.subr.mxu0 0.0
      %798 = vmatpush1.xpose.msra.mxu0 0.0
      %799 = vmatprep.subr.mxu0 0.0
      %800 = vmatpush1.xpose.msra.mxu0 0.0
      %801 = vmatprep.subr.mxu0 0.0
      %802 = vmatpush1.xpose.msra.mxu0 0.0
      %803 = vmatprep.subr.mxu0 0.0
      %804 = vmatpush1.xpose.msra.mxu0 0.0
      %805 = vmatprep.subr.mxu0 0.0
      %806 = vmatpush1.xpose.msra.mxu0 0.0
      %807 = vmatprep.subr.mxu0 0.0
      %808 = vmatpush1.xpose.msra.mxu0 0.0
      %809 = vmatprep.subr.mxu0 0.0
      %810 = vmatpush1.xpose.msra.mxu0 0.0
      %811 = vmatprep.subr.mxu0 0.0
      %812 = vmatpush1.xpose.msra.mxu0 0.0
      %813 = vmatprep.subr.mxu0 0.0
      %814 = vmatpush1.xpose.msra.mxu0 0.0
      %815 = vmatprep.subr.mxu0 0.0
      %816 = vmatpush1.xpose.msra.mxu0 0.0
      %817 = vmatprep.subr.mxu0 0.0
      %818 = vmatpush1.xpose.msra.mxu0 0.0
      %819 = vmatprep.subr.mxu0 0.0
      %820 = vmatpush1.xpose.msra.mxu0 0.0
      %821 = vmatprep.subr.mxu0 0.0
      %822 = vmatpush1.xpose.msra.mxu0 0.0
      %823 = vmatprep.subr.mxu0 0.0
      %824 = vmatpush1.xpose.msra.mxu0 0.0
      %825 = vmatprep.subr.mxu0 0.0
      %826 = vmatpush1.xpose.msra.mxu0 0.0
      %827 = vmatprep.mubr.f32.mxu0 0.0
      %828 = vmatmul.mubr.f32.gmra.mrb[0].mxu0 %v758
      %v829 = vpop.f32.mrb[0].mxu0
      %v830 = vadd.f32 0.0, %v829
      %v831 = vpop.f32.mrb[0].mxu0
      %832 = vdwg.mxu0
      %s833 = scalar_lea.vmem %s332, 16
      %v834 = vld [vmem:[%s833] sm:$0xff]
      %v835 = vmul.f32 %v518, %v834
      %v836 = vrot.slane %v673, 2
      %v837 = vsel %vm437, %v836, 0
      %v840 = vsel %vm437, %v835, 0
      %842 = vmatprep.subr.mxu0 0.0
      %843 = vmatpush1.xpose.msra.mxu0 %v840
      %844 = vmatprep.subr.mxu0 0.0
      %845 = vmatpush1.xpose.msra.mxu0 0.0
      %846 = vmatprep.subr.mxu0 0.0
      %847 = vmatpush1.xpose.msra.mxu0 0.0
      %848 = vmatprep.subr.mxu0 0.0
      %849 = vmatpush1.xpose.msra.mxu0 0.0
      %850 = vmatprep.subr.mxu0 0.0
      %851 = vmatpush1.xpose.msra.mxu0 0.0
      %852 = vmatprep.subr.mxu0 0.0
      %853 = vmatpush1.xpose.msra.mxu0 0.0
      %854 = vmatprep.subr.mxu0 0.0
      %855 = vmatpush1.xpose.msra.mxu0 0.0
      %856 = vmatprep.subr.mxu0 0.0
      %857 = vmatpush1.xpose.msra.mxu0 0.0
      %858 = vmatprep.subr.mxu0 0.0
      %859 = vmatpush1.xpose.msra.mxu0 0.0
      %860 = vmatprep.subr.mxu0 0.0
      %861 = vmatpush1.xpose.msra.mxu0 0.0
      %862 = vmatprep.subr.mxu0 0.0
      %863 = vmatpush1.xpose.msra.mxu0 0.0
      %864 = vmatprep.subr.mxu0 0.0
      %865 = vmatpush1.xpose.msra.mxu0 0.0
      %866 = vmatprep.subr.mxu0 0.0
      %867 = vmatpush1.xpose.msra.mxu0 0.0
      %868 = vmatprep.subr.mxu0 0.0
      %869 = vmatpush1.xpose.msra.mxu0 0.0
      %870 = vmatprep.subr.mxu0 0.0
      %871 = vmatpush1.xpose.msra.mxu0 0.0
      %872 = vmatprep.subr.mxu0 0.0
      %873 = vmatpush1.xpose.msra.mxu0 0.0
      %874 = vmatprep.subr.mxu0 0.0
      %875 = vmatpush1.xpose.msra.mxu0 0.0
      %876 = vmatprep.subr.mxu0 0.0
      %877 = vmatpush1.xpose.msra.mxu0 0.0
      %878 = vmatprep.subr.mxu0 0.0
      %879 = vmatpush1.xpose.msra.mxu0 0.0
      %880 = vmatprep.subr.mxu0 0.0
      %881 = vmatpush1.xpose.msra.mxu0 0.0
      %882 = vmatprep.subr.mxu0 0.0
      %883 = vmatpush1.xpose.msra.mxu0 0.0
      %884 = vmatprep.subr.mxu0 0.0
      %885 = vmatpush1.xpose.msra.mxu0 0.0
      %886 = vmatprep.subr.mxu0 0.0
      %887 = vmatpush1.xpose.msra.mxu0 0.0
      %888 = vmatprep.subr.mxu0 0.0
      %889 = vmatpush1.xpose.msra.mxu0 0.0
      %890 = vmatprep.subr.mxu0 0.0
      %891 = vmatpush1.xpose.msra.mxu0 0.0
      %892 = vmatprep.subr.mxu0 0.0
      %893 = vmatpush1.xpose.msra.mxu0 0.0
      %894 = vmatprep.subr.mxu0 0.0
      %895 = vmatpush1.xpose.msra.mxu0 0.0
      %896 = vmatprep.subr.mxu0 0.0
      %897 = vmatpush1.xpose.msra.mxu0 0.0
      %898 = vmatprep.subr.mxu0 0.0
      %899 = vmatpush1.xpose.msra.mxu0 0.0
      %900 = vmatprep.subr.mxu0 0.0
      %901 = vmatpush1.xpose.msra.mxu0 0.0
      %902 = vmatprep.subr.mxu0 0.0
      %903 = vmatpush1.xpose.msra.mxu0 0.0
      %904 = vmatprep.subr.mxu0 0.0
      %905 = vmatpush1.xpose.msra.mxu0 0.0
      %906 = vmatprep.mubr.f32.mxu0 0.0
      %907 = vmatmul.mubr.f32.gmra.mrb[0].mxu0 %v837
      %v908 = vpop.f32.mrb[0].mxu0
      %v909 = vadd.f32 0.0, %v908
      %v910 = vpop.f32.mrb[0].mxu0
      %911 = vdwg.mxu0
      %v913 = vrot.slane %v830, 7
      %v916 = vrot.slane %v909, 6
      %vm918 = vcmask 1040384
      %v919 = vsel %vm918, %v751, %v913
      %vm920 = vcmask 1041408
      %v921 = vsel %vm920, %v919, %v916
      %v922 = vld [vmem:[%s336] sm:$0x7]
      %v923 = vlaneseq
      %v924 = vshrl.u32 %v923, 7
      %v925 = vsub.s32 0, %v924
      %v926 = vrot.slane %v595, %v925
      %v927 = vmul.f32 %v921, %v926
      %v928 = vadd.f32 %v922, %v927
      %vm929 = vcmask 59392
      %930 = vst.msk [vmem:[%s336] sm:$0x7] %vm929, %v928
      %p931 = scmp.eq.s32.totalorder %s23, 3
      // Predicated region
      $region53: #{tpu_custom_call.1} parent=47 // pred_check
        %p932 = pneg %p931
      $region54: #{tpu_custom_call.1} parent=47 // pred_check_branch
        %934 = sbr.rel (%p932) target = $region56
      $region55: #{tpu_custom_call.1} parent=47 // pred_region
        %v935 = vld [vmem:[%s336] sm:$0x7]
        %v936 = vld [vmem:[%s6] sm:$0x7]
        %938 = vset.pattern.permute.xlu0 0
        %939 = vperm.xlu0 %938, %v936
        %v940 = vpop.permute.xlu0 %939
        %v942 = vadd.f32 %v935, %v940
        %943 = vst.msk [vmem:[%s336] sm:$0x7] %vm929, %v942
      $region56: #{tpu_custom_call.1} parent=47 // pred_fallthru
        _
      %p944 = scmp.lt.s32.totalorder %s22, 1
      %s945 = scalar_select %p944, %s22, 1
      %s946 = smul.addr %s945, 4
      %s947 = scalar_lea.vmem %s7, %s946
      // Predicated region
      $region57: #{tpu_custom_call.1} parent=47 // pred_check
        %p948 = pneg %p212
      $region58: #{tpu_custom_call.1} parent=47 // pred_check_branch
        %950 = sbr.rel (%p948) target = $region60
      $region59: #{tpu_custom_call.1} parent=47 // pred_region
        _
      $region60: #{tpu_custom_call.1} parent=47 // pred_fallthru
        _
    $region48: #{tpu_custom_call.1} parent=5 // pred_fallthru
      _
    %p951 = scmp.le.s32.totalorder 2, %s13
    // Predicated region
    $region61: #{tpu_custom_call.1} parent=5 // pred_check
      %p952 = pneg %p951
    $region62: #{tpu_custom_call.1} parent=5 // pred_check_branch
      %954 = sbr.rel (%p952) target = $region64
    $region63: #{tpu_custom_call.1} parent=5 // pred_region
      %s955 = ssub.s32 %s13, 2
      // Predicated region
      $region65: #{tpu_custom_call.1} parent=63 // pred_check
        %p956 = pneg %p218
      $region66: #{tpu_custom_call.1} parent=63 // pred_check_branch
        %958 = sbr.rel (%p956) target = $region68
      $region67: #{tpu_custom_call.1} parent=63 // pred_region
        %p959 = scmp.lt.s32.totalorder %s24, 1
        %s960 = scalar_select %p959, %s24, 1
        %s961 = smul.addr %s960, 4
        %s962 = scalar_lea.vmem %s7, %s961
      $region68: #{tpu_custom_call.1} parent=63 // pred_fallthru
        _
    $region64: #{tpu_custom_call.1} parent=5 // pred_fallthru
      _
  $region6: #{tpu_custom_call.1} parent=0 // loop_footer
    %s17 = sadd.s32 1, %s13
  $region7: #{tpu_custom_call.1} parent=0 // loop_footer_branch
    %12 = sbr.rel target = $region3
  $region8: #{tpu_custom_call.1} parent=0 // loop_exit
    _

</llo_original>
